<compile_context>
chip_gen: v5e
topology: v5e:2x2
jax: 0.10.0
libtpu: 0.0.40
codegen_flags: <defaults>
</compile_context>

<pallas_src>
import functools

import numpy as np
import jax
import jax.numpy as jnp
from jax import lax
from jax.experimental import pallas as pl
from jax.experimental.pallas import tpu as pltpu


def index_put_kernel(x_ref, idx_ref, val_ref, out_ref, *, chunk):
    # x_ref:   (1, N_pad) int32  -- input row, lane-dense (full 128-lane tile)
    # idx_ref: (K_pad, 1) int32  -- scatter indices (column -> broadcasts over lanes),
    #                               already wrapped for negatives, padded with a
    #                               sentinel (>= N_pad) that never matches.
    # val_ref: (K_pad, 1) int32  -- scatter values
    # out_ref: (1, N_pad) int32
    K_pad = idx_ref.shape[0]
    N_pad = x_ref.shape[1]
    C = chunk
    n_chunks = K_pad // C

    # Hoisted loop-invariant iotas (one (C, N_pad) tile each).
    pos = lax.broadcasted_iota(jnp.int32, (C, N_pad), 1)   # output position p (lanes)
    kk = lax.broadcasted_iota(jnp.int32, (C, N_pad), 0)    # local scatter step k

    def body(c, carry):
        hit, best_val = carry
        c0 = pl.multiple_of(c * C, C)
        idx_c = idx_ref[pl.ds(c0, C), :]                    # (C, 1)
        val_c = val_ref[pl.ds(c0, C), :]                    # (C, 1)

        match = idx_c == pos                                # (C, N_pad)
        masked_k = jnp.where(match, kk, -1)                 # (C, N_pad)
        winner = jnp.max(masked_k, axis=0, keepdims=True)   # (1, N_pad)
        chunk_hit = winner >= 0                             # (1, N_pad)

        # Reuse masked_k for the one-hot select.  Invariant: on no-hit lanes
        # (winner == -1) `sel` selects *every* non-matching row and `chunk_val`
        # is garbage (possible int32 wraparound) -- this is only correct because
        # it is masked out by `chunk_hit` below.  Keep that mask.
        sel = masked_k == winner                            # (C, N_pad)
        chunk_val = jnp.sum(jnp.where(sel, val_c, 0),
                            axis=0, keepdims=True)          # (1, N_pad)

        # Later chunks are later in k-order -> they always override on a hit.
        best_val = jnp.where(chunk_hit, chunk_val, best_val)
        hit = jnp.logical_or(hit, chunk_hit)
        return hit, best_val

    init = (jnp.zeros((1, N_pad), dtype=jnp.bool_),
            jnp.zeros((1, N_pad), dtype=x_ref.dtype))
    hit, best_val = lax.fori_loop(0, n_chunks, body, init, unroll=True)

    # Every output lane is written (required for input_output_aliases={0: 0}).
    out_ref[...] = jnp.where(hit, best_val, x_ref[...])


def index_put_1d_nonaccumulate(x, index, value, *, chunk=32):
    """x: (N,) int32, index: (K,) int32, value: (K,) int32 -> (N,) int32."""
    N = x.shape[0]
    K = index.shape[0]

    N_pad = pl.cdiv(N, 128) * 128          # full lane tile -> unmasked stores
    K_pad = pl.cdiv(K, chunk) * chunk      # whole chunks

    # Torch-style negative index wrap (relative to the *original* N), then pad
    # with a sentinel (N_pad) that can never match an output position.
    idx = index.astype(jnp.int32)
    idx = jnp.where(idx < 0, idx + N, idx)
    idx = jnp.pad(idx, (0, K_pad - K), constant_values=N_pad)
    val = jnp.pad(value.astype(x.dtype), (0, K_pad - K))

    x2d = jnp.pad(x, (0, N_pad - N)).reshape(1, N_pad)      # lane-dense padded slab
    idx2d = idx.reshape(K_pad, 1)
    val2d = val.reshape(K_pad, 1)

    out2d = pl.pallas_call(
        functools.partial(index_put_kernel, chunk=chunk),
        out_shape=jax.ShapeDtypeStruct((1, N_pad), x.dtype),
        in_specs=[
            pl.BlockSpec(memory_space=pltpu.MemorySpace.VMEM),
            pl.BlockSpec(memory_space=pltpu.MemorySpace.VMEM),
            pl.BlockSpec(memory_space=pltpu.MemorySpace.VMEM),
        ],
        out_specs=pl.BlockSpec(memory_space=pltpu.MemorySpace.VMEM),
        input_output_aliases={0: 0},        # output reuses padded input buffer
    )(x2d, idx2d, val2d)
    return out2d.reshape(N_pad)[:N]


if __name__ == "__main__":
    key = jax.random.PRNGKey(0)
    k_x, k_i, k_v = jax.random.split(key, 3)

    # Shapes matching the torch-mlir e2e test: input(100), index(250), value(250).
    N, K = 100, 250
    x = jax.random.randint(k_x, (N,), 0, 1000, dtype=jnp.int32)
    index = jax.random.randint(k_i, (K,), 0, N, dtype=jnp.int32)
    value = jax.random.randint(k_v, (K,), 0, 1000, dtype=jnp.int32)

    out = index_put_1d_nonaccumulate(x, index, value)
    out = jax.block_until_ready(out)

    # Reference: sequential scatter with overwrite (accumulate=False, last write wins).
    expected = np.asarray(jax.device_get(x)).copy()
    idx_np = np.asarray(jax.device_get(index))
    val_np = np.asarray(jax.device_get(value))
    for k in range(K):
        p = int(idx_np[k])
        if p < 0:
            p += N
        expected[p] = val_np[k]

    out_np = np.asarray(jax.device_get(out))
    assert out.shape == (N,) and out.dtype == jnp.int32
    assert np.array_equal(out_np, expected)
    print("KERNEL_OK")
</pallas_src>

<mosaic_0001>
module attributes {stable_mosaic.version = 11 : i64} {
  func.func @index_put_kernel(%arg0: memref<1x128xi32, #tpu.memory_space<vmem>>, %arg1: memref<256x1xi32, #tpu.memory_space<vmem>>, %arg2: memref<256x1xi32, #tpu.memory_space<vmem>>, %arg3: memref<1x128xi32, #tpu.memory_space<vmem>>) attributes {dimension_semantics = [], scalar_prefetch = 0 : i64, scratch_operands = 0 : i64, tpu.core_type = #tpu.core_type<tc>} {
    %0 = tpu.iota {dimensions = array<i32: 1>} : vector<32x128xi32>
    %1 = tpu.iota {dimensions = array<i32: 0>} : vector<32x128xi32>
    %false = arith.constant false
    %2 = vector.broadcast %false : i1 to vector<1x128xi1>
    %c0_i32 = arith.constant 0 : i32
    %3 = vector.broadcast %c0_i32 : i32 to vector<1x128xi32>
    %c0_i32_0 = arith.constant 0 : i32
    %c32_i32 = arith.constant 32 : i32
    %4 = arith.muli %c0_i32_0, %c32_i32 : i32
    %5 = tpu.assume_multiple %4, 32 : i32
    %6 = arith.index_cast %5 : i32 to index
    %c0 = arith.constant 0 : index
    %7 = vector.load %arg1[%6, %c0] : memref<256x1xi32, #tpu.memory_space<vmem>>, vector<32x1xi32>
    %8 = arith.index_cast %5 : i32 to index
    %c0_1 = arith.constant 0 : index
    %9 = vector.load %arg2[%8, %c0_1] : memref<256x1xi32, #tpu.memory_space<vmem>>, vector<32x1xi32>
    %10 = vector.broadcast %7 : vector<32x1xi32> to vector<32x128xi32>
    %11 = arith.cmpi eq, %10, %0 : vector<32x128xi32>
    %c-1_i32 = arith.constant -1 : i32
    %12 = vector.broadcast %c-1_i32 : i32 to vector<32x128xi32>
    %13 = arith.select %11, %1, %12 : vector<32x128xi1>, vector<32x128xi32>
    %cst = arith.constant dense<-2147483648> : vector<128xi32>
    %14 = vector.multi_reduction <maxsi>, %13, %cst [0] : vector<32x128xi32> to vector<128xi32>
    %15 = vector.shape_cast %14 : vector<128xi32> to vector<1x128xi32>
    %c0_i32_2 = arith.constant 0 : i32
    %16 = vector.broadcast %c0_i32_2 : i32 to vector<1x128xi32>
    %17 = arith.cmpi sge, %15, %16 : vector<1x128xi32>
    %18 = vector.broadcast %15 : vector<1x128xi32> to vector<32x128xi32>
    %19 = arith.cmpi eq, %13, %18 : vector<32x128xi32>
    %c0_i32_3 = arith.constant 0 : i32
    %20 = vector.shape_cast %9 : vector<32x1xi32> to vector<32x1xi32>
    %21 = vector.broadcast %20 : vector<32x1xi32> to vector<32x128xi32>
    %22 = vector.broadcast %c0_i32_3 : i32 to vector<32x128xi32>
    %23 = arith.select %19, %21, %22 : vector<32x128xi1>, vector<32x128xi32>
    %cst_4 = arith.constant dense<0> : vector<128xi32>
    %24 = vector.multi_reduction <add>, %23, %cst_4 [0] : vector<32x128xi32> to vector<128xi32>
    %25 = vector.shape_cast %24 : vector<128xi32> to vector<1x128xi32>
    %26 = arith.select %17, %25, %3 : vector<1x128xi1>, vector<1x128xi32>
    %27 = arith.ori %2, %17 : vector<1x128xi1>
    %c1_i32 = arith.constant 1 : i32
    %c32_i32_5 = arith.constant 32 : i32
    %28 = arith.muli %c1_i32, %c32_i32_5 : i32
    %29 = tpu.assume_multiple %28, 32 : i32
    %30 = arith.index_cast %29 : i32 to index
    %c0_6 = arith.constant 0 : index
    %31 = vector.load %arg1[%30, %c0_6] : memref<256x1xi32, #tpu.memory_space<vmem>>, vector<32x1xi32>
    %32 = arith.index_cast %29 : i32 to index
    %c0_7 = arith.constant 0 : index
    %33 = vector.load %arg2[%32, %c0_7] : memref<256x1xi32, #tpu.memory_space<vmem>>, vector<32x1xi32>
    %34 = vector.broadcast %31 : vector<32x1xi32> to vector<32x128xi32>
    %35 = arith.cmpi eq, %34, %0 : vector<32x128xi32>
    %c-1_i32_8 = arith.constant -1 : i32
    %36 = vector.broadcast %c-1_i32_8 : i32 to vector<32x128xi32>
    %37 = arith.select %35, %1, %36 : vector<32x128xi1>, vector<32x128xi32>
    %cst_9 = arith.constant dense<-2147483648> : vector<128xi32>
    %38 = vector.multi_reduction <maxsi>, %37, %cst_9 [0] : vector<32x128xi32> to vector<128xi32>
    %39 = vector.shape_cast %38 : vector<128xi32> to vector<1x128xi32>
    %c0_i32_10 = arith.constant 0 : i32
    %40 = vector.broadcast %c0_i32_10 : i32 to vector<1x128xi32>
    %41 = arith.cmpi sge, %39, %40 : vector<1x128xi32>
    %42 = vector.broadcast %39 : vector<1x128xi32> to vector<32x128xi32>
    %43 = arith.cmpi eq, %37, %42 : vector<32x128xi32>
    %c0_i32_11 = arith.constant 0 : i32
    %44 = vector.shape_cast %33 : vector<32x1xi32> to vector<32x1xi32>
    %45 = vector.broadcast %44 : vector<32x1xi32> to vector<32x128xi32>
    %46 = vector.broadcast %c0_i32_11 : i32 to vector<32x128xi32>
    %47 = arith.select %43, %45, %46 : vector<32x128xi1>, vector<32x128xi32>
    %cst_12 = arith.constant dense<0> : vector<128xi32>
    %48 = vector.multi_reduction <add>, %47, %cst_12 [0] : vector<32x128xi32> to vector<128xi32>
    %49 = vector.shape_cast %48 : vector<128xi32> to vector<1x128xi32>
    %50 = arith.select %41, %49, %26 : vector<1x128xi1>, vector<1x128xi32>
    %51 = arith.ori %27, %41 : vector<1x128xi1>
    %c2_i32 = arith.constant 2 : i32
    %c32_i32_13 = arith.constant 32 : i32
    %52 = arith.muli %c2_i32, %c32_i32_13 : i32
    %53 = tpu.assume_multiple %52, 32 : i32
    %54 = arith.index_cast %53 : i32 to index
    %c0_14 = arith.constant 0 : index
    %55 = vector.load %arg1[%54, %c0_14] : memref<256x1xi32, #tpu.memory_space<vmem>>, vector<32x1xi32>
    %56 = arith.index_cast %53 : i32 to index
    %c0_15 = arith.constant 0 : index
    %57 = vector.load %arg2[%56, %c0_15] : memref<256x1xi32, #tpu.memory_space<vmem>>, vector<32x1xi32>
    %58 = vector.broadcast %55 : vector<32x1xi32> to vector<32x128xi32>
    %59 = arith.cmpi eq, %58, %0 : vector<32x128xi32>
    %c-1_i32_16 = arith.constant -1 : i32
    %60 = vector.broadcast %c-1_i32_16 : i32 to vector<32x128xi32>
    %61 = arith.select %59, %1, %60 : vector<32x128xi1>, vector<32x128xi32>
    %cst_17 = arith.constant dense<-2147483648> : vector<128xi32>
    %62 = vector.multi_reduction <maxsi>, %61, %cst_17 [0] : vector<32x128xi32> to vector<128xi32>
    %63 = vector.shape_cast %62 : vector<128xi32> to vector<1x128xi32>
    %c0_i32_18 = arith.constant 0 : i32
    %64 = vector.broadcast %c0_i32_18 : i32 to vector<1x128xi32>
    %65 = arith.cmpi sge, %63, %64 : vector<1x128xi32>
    %66 = vector.broadcast %63 : vector<1x128xi32> to vector<32x128xi32>
    %67 = arith.cmpi eq, %61, %66 : vector<32x128xi32>
    %c0_i32_19 = arith.constant 0 : i32
    %68 = vector.shape_cast %57 : vector<32x1xi32> to vector<32x1xi32>
    %69 = vector.broadcast %68 : vector<32x1xi32> to vector<32x128xi32>
    %70 = vector.broadcast %c0_i32_19 : i32 to vector<32x128xi32>
    %71 = arith.select %67, %69, %70 : vector<32x128xi1>, vector<32x128xi32>
    %cst_20 = arith.constant dense<0> : vector<128xi32>
    %72 = vector.multi_reduction <add>, %71, %cst_20 [0] : vector<32x128xi32> to vector<128xi32>
    %73 = vector.shape_cast %72 : vector<128xi32> to vector<1x128xi32>
    %74 = arith.select %65, %73, %50 : vector<1x128xi1>, vector<1x128xi32>
    %75 = arith.ori %51, %65 : vector<1x128xi1>
    %c3_i32 = arith.constant 3 : i32
    %c32_i32_21 = arith.constant 32 : i32
    %76 = arith.muli %c3_i32, %c32_i32_21 : i32
    %77 = tpu.assume_multiple %76, 32 : i32
    %78 = arith.index_cast %77 : i32 to index
    %c0_22 = arith.constant 0 : index
    %79 = vector.load %arg1[%78, %c0_22] : memref<256x1xi32, #tpu.memory_space<vmem>>, vector<32x1xi32>
    %80 = arith.index_cast %77 : i32 to index
    %c0_23 = arith.constant 0 : index
    %81 = vector.load %arg2[%80, %c0_23] : memref<256x1xi32, #tpu.memory_space<vmem>>, vector<32x1xi32>
    %82 = vector.broadcast %79 : vector<32x1xi32> to vector<32x128xi32>
    %83 = arith.cmpi eq, %82, %0 : vector<32x128xi32>
    %c-1_i32_24 = arith.constant -1 : i32
    %84 = vector.broadcast %c-1_i32_24 : i32 to vector<32x128xi32>
    %85 = arith.select %83, %1, %84 : vector<32x128xi1>, vector<32x128xi32>
    %cst_25 = arith.constant dense<-2147483648> : vector<128xi32>
    %86 = vector.multi_reduction <maxsi>, %85, %cst_25 [0] : vector<32x128xi32> to vector<128xi32>
    %87 = vector.shape_cast %86 : vector<128xi32> to vector<1x128xi32>
    %c0_i32_26 = arith.constant 0 : i32
    %88 = vector.broadcast %c0_i32_26 : i32 to vector<1x128xi32>
    %89 = arith.cmpi sge, %87, %88 : vector<1x128xi32>
    %90 = vector.broadcast %87 : vector<1x128xi32> to vector<32x128xi32>
    %91 = arith.cmpi eq, %85, %90 : vector<32x128xi32>
    %c0_i32_27 = arith.constant 0 : i32
    %92 = vector.shape_cast %81 : vector<32x1xi32> to vector<32x1xi32>
    %93 = vector.broadcast %92 : vector<32x1xi32> to vector<32x128xi32>
    %94 = vector.broadcast %c0_i32_27 : i32 to vector<32x128xi32>
    %95 = arith.select %91, %93, %94 : vector<32x128xi1>, vector<32x128xi32>
    %cst_28 = arith.constant dense<0> : vector<128xi32>
    %96 = vector.multi_reduction <add>, %95, %cst_28 [0] : vector<32x128xi32> to vector<128xi32>
    %97 = vector.shape_cast %96 : vector<128xi32> to vector<1x128xi32>
    %98 = arith.select %89, %97, %74 : vector<1x128xi1>, vector<1x128xi32>
    %99 = arith.ori %75, %89 : vector<1x128xi1>
    %c4_i32 = arith.constant 4 : i32
    %c32_i32_29 = arith.constant 32 : i32
    %100 = arith.muli %c4_i32, %c32_i32_29 : i32
    %101 = tpu.assume_multiple %100, 32 : i32
    %102 = arith.index_cast %101 : i32 to index
    %c0_30 = arith.constant 0 : index
    %103 = vector.load %arg1[%102, %c0_30] : memref<256x1xi32, #tpu.memory_space<vmem>>, vector<32x1xi32>
    %104 = arith.index_cast %101 : i32 to index
    %c0_31 = arith.constant 0 : index
    %105 = vector.load %arg2[%104, %c0_31] : memref<256x1xi32, #tpu.memory_space<vmem>>, vector<32x1xi32>
    %106 = vector.broadcast %103 : vector<32x1xi32> to vector<32x128xi32>
    %107 = arith.cmpi eq, %106, %0 : vector<32x128xi32>
    %c-1_i32_32 = arith.constant -1 : i32
    %108 = vector.broadcast %c-1_i32_32 : i32 to vector<32x128xi32>
    %109 = arith.select %107, %1, %108 : vector<32x128xi1>, vector<32x128xi32>
    %cst_33 = arith.constant dense<-2147483648> : vector<128xi32>
    %110 = vector.multi_reduction <maxsi>, %109, %cst_33 [0] : vector<32x128xi32> to vector<128xi32>
    %111 = vector.shape_cast %110 : vector<128xi32> to vector<1x128xi32>
    %c0_i32_34 = arith.constant 0 : i32
    %112 = vector.broadcast %c0_i32_34 : i32 to vector<1x128xi32>
    %113 = arith.cmpi sge, %111, %112 : vector<1x128xi32>
    %114 = vector.broadcast %111 : vector<1x128xi32> to vector<32x128xi32>
    %115 = arith.cmpi eq, %109, %114 : vector<32x128xi32>
    %c0_i32_35 = arith.constant 0 : i32
    %116 = vector.shape_cast %105 : vector<32x1xi32> to vector<32x1xi32>
    %117 = vector.broadcast %116 : vector<32x1xi32> to vector<32x128xi32>
    %118 = vector.broadcast %c0_i32_35 : i32 to vector<32x128xi32>
    %119 = arith.select %115, %117, %118 : vector<32x128xi1>, vector<32x128xi32>
    %cst_36 = arith.constant dense<0> : vector<128xi32>
    %120 = vector.multi_reduction <add>, %119, %cst_36 [0] : vector<32x128xi32> to vector<128xi32>
    %121 = vector.shape_cast %120 : vector<128xi32> to vector<1x128xi32>
    %122 = arith.select %113, %121, %98 : vector<1x128xi1>, vector<1x128xi32>
    %123 = arith.ori %99, %113 : vector<1x128xi1>
    %c5_i32 = arith.constant 5 : i32
    %c32_i32_37 = arith.constant 32 : i32
    %124 = arith.muli %c5_i32, %c32_i32_37 : i32
    %125 = tpu.assume_multiple %124, 32 : i32
    %126 = arith.index_cast %125 : i32 to index
    %c0_38 = arith.constant 0 : index
    %127 = vector.load %arg1[%126, %c0_38] : memref<256x1xi32, #tpu.memory_space<vmem>>, vector<32x1xi32>
    %128 = arith.index_cast %125 : i32 to index
    %c0_39 = arith.constant 0 : index
    %129 = vector.load %arg2[%128, %c0_39] : memref<256x1xi32, #tpu.memory_space<vmem>>, vector<32x1xi32>
    %130 = vector.broadcast %127 : vector<32x1xi32> to vector<32x128xi32>
    %131 = arith.cmpi eq, %130, %0 : vector<32x128xi32>
    %c-1_i32_40 = arith.constant -1 : i32
    %132 = vector.broadcast %c-1_i32_40 : i32 to vector<32x128xi32>
    %133 = arith.select %131, %1, %132 : vector<32x128xi1>, vector<32x128xi32>
    %cst_41 = arith.constant dense<-2147483648> : vector<128xi32>
    %134 = vector.multi_reduction <maxsi>, %133, %cst_41 [0] : vector<32x128xi32> to vector<128xi32>
    %135 = vector.shape_cast %134 : vector<128xi32> to vector<1x128xi32>
    %c0_i32_42 = arith.constant 0 : i32
    %136 = vector.broadcast %c0_i32_42 : i32 to vector<1x128xi32>
    %137 = arith.cmpi sge, %135, %136 : vector<1x128xi32>
    %138 = vector.broadcast %135 : vector<1x128xi32> to vector<32x128xi32>
    %139 = arith.cmpi eq, %133, %138 : vector<32x128xi32>
    %c0_i32_43 = arith.constant 0 : i32
    %140 = vector.shape_cast %129 : vector<32x1xi32> to vector<32x1xi32>
    %141 = vector.broadcast %140 : vector<32x1xi32> to vector<32x128xi32>
    %142 = vector.broadcast %c0_i32_43 : i32 to vector<32x128xi32>
    %143 = arith.select %139, %141, %142 : vector<32x128xi1>, vector<32x128xi32>
    %cst_44 = arith.constant dense<0> : vector<128xi32>
    %144 = vector.multi_reduction <add>, %143, %cst_44 [0] : vector<32x128xi32> to vector<128xi32>
    %145 = vector.shape_cast %144 : vector<128xi32> to vector<1x128xi32>
    %146 = arith.select %137, %145, %122 : vector<1x128xi1>, vector<1x128xi32>
    %147 = arith.ori %123, %137 : vector<1x128xi1>
    %c6_i32 = arith.constant 6 : i32
    %c32_i32_45 = arith.constant 32 : i32
    %148 = arith.muli %c6_i32, %c32_i32_45 : i32
    %149 = tpu.assume_multiple %148, 32 : i32
    %150 = arith.index_cast %149 : i32 to index
    %c0_46 = arith.constant 0 : index
    %151 = vector.load %arg1[%150, %c0_46] : memref<256x1xi32, #tpu.memory_space<vmem>>, vector<32x1xi32>
    %152 = arith.index_cast %149 : i32 to index
    %c0_47 = arith.constant 0 : index
    %153 = vector.load %arg2[%152, %c0_47] : memref<256x1xi32, #tpu.memory_space<vmem>>, vector<32x1xi32>
    %154 = vector.broadcast %151 : vector<32x1xi32> to vector<32x128xi32>
    %155 = arith.cmpi eq, %154, %0 : vector<32x128xi32>
    %c-1_i32_48 = arith.constant -1 : i32
    %156 = vector.broadcast %c-1_i32_48 : i32 to vector<32x128xi32>
    %157 = arith.select %155, %1, %156 : vector<32x128xi1>, vector<32x128xi32>
    %cst_49 = arith.constant dense<-2147483648> : vector<128xi32>
    %158 = vector.multi_reduction <maxsi>, %157, %cst_49 [0] : vector<32x128xi32> to vector<128xi32>
    %159 = vector.shape_cast %158 : vector<128xi32> to vector<1x128xi32>
    %c0_i32_50 = arith.constant 0 : i32
    %160 = vector.broadcast %c0_i32_50 : i32 to vector<1x128xi32>
    %161 = arith.cmpi sge, %159, %160 : vector<1x128xi32>
    %162 = vector.broadcast %159 : vector<1x128xi32> to vector<32x128xi32>
    %163 = arith.cmpi eq, %157, %162 : vector<32x128xi32>
    %c0_i32_51 = arith.constant 0 : i32
    %164 = vector.shape_cast %153 : vector<32x1xi32> to vector<32x1xi32>
    %165 = vector.broadcast %164 : vector<32x1xi32> to vector<32x128xi32>
    %166 = vector.broadcast %c0_i32_51 : i32 to vector<32x128xi32>
    %167 = arith.select %163, %165, %166 : vector<32x128xi1>, vector<32x128xi32>
    %cst_52 = arith.constant dense<0> : vector<128xi32>
    %168 = vector.multi_reduction <add>, %167, %cst_52 [0] : vector<32x128xi32> to vector<128xi32>
    %169 = vector.shape_cast %168 : vector<128xi32> to vector<1x128xi32>
    %170 = arith.select %161, %169, %146 : vector<1x128xi1>, vector<1x128xi32>
    %171 = arith.ori %147, %161 : vector<1x128xi1>
    %c7_i32 = arith.constant 7 : i32
    %c32_i32_53 = arith.constant 32 : i32
    %172 = arith.muli %c7_i32, %c32_i32_53 : i32
    %173 = tpu.assume_multiple %172, 32 : i32
    %174 = arith.index_cast %173 : i32 to index
    %c0_54 = arith.constant 0 : index
    %175 = vector.load %arg1[%174, %c0_54] : memref<256x1xi32, #tpu.memory_space<vmem>>, vector<32x1xi32>
    %176 = arith.index_cast %173 : i32 to index
    %c0_55 = arith.constant 0 : index
    %177 = vector.load %arg2[%176, %c0_55] : memref<256x1xi32, #tpu.memory_space<vmem>>, vector<32x1xi32>
    %178 = vector.broadcast %175 : vector<32x1xi32> to vector<32x128xi32>
    %179 = arith.cmpi eq, %178, %0 : vector<32x128xi32>
    %c-1_i32_56 = arith.constant -1 : i32
    %180 = vector.broadcast %c-1_i32_56 : i32 to vector<32x128xi32>
    %181 = arith.select %179, %1, %180 : vector<32x128xi1>, vector<32x128xi32>
    %cst_57 = arith.constant dense<-2147483648> : vector<128xi32>
    %182 = vector.multi_reduction <maxsi>, %181, %cst_57 [0] : vector<32x128xi32> to vector<128xi32>
    %183 = vector.shape_cast %182 : vector<128xi32> to vector<1x128xi32>
    %c0_i32_58 = arith.constant 0 : i32
    %184 = vector.broadcast %c0_i32_58 : i32 to vector<1x128xi32>
    %185 = arith.cmpi sge, %183, %184 : vector<1x128xi32>
    %186 = vector.broadcast %183 : vector<1x128xi32> to vector<32x128xi32>
    %187 = arith.cmpi eq, %181, %186 : vector<32x128xi32>
    %c0_i32_59 = arith.constant 0 : i32
    %188 = vector.shape_cast %177 : vector<32x1xi32> to vector<32x1xi32>
    %189 = vector.broadcast %188 : vector<32x1xi32> to vector<32x128xi32>
    %190 = vector.broadcast %c0_i32_59 : i32 to vector<32x128xi32>
    %191 = arith.select %187, %189, %190 : vector<32x128xi1>, vector<32x128xi32>
    %cst_60 = arith.constant dense<0> : vector<128xi32>
    %192 = vector.multi_reduction <add>, %191, %cst_60 [0] : vector<32x128xi32> to vector<128xi32>
    %193 = vector.shape_cast %192 : vector<128xi32> to vector<1x128xi32>
    %194 = arith.select %185, %193, %170 : vector<1x128xi1>, vector<1x128xi32>
    %195 = arith.ori %171, %185 : vector<1x128xi1>
    %c8_i32 = arith.constant 8 : i32
    %c0_61 = arith.constant 0 : index
    %c0_62 = arith.constant 0 : index
    %196 = vector.load %arg0[%c0_61, %c0_62] : memref<1x128xi32, #tpu.memory_space<vmem>>, vector<1x128xi32>
    %197 = arith.select %195, %194, %196 : vector<1x128xi1>, vector<1x128xi32>
    %c0_63 = arith.constant 0 : index
    %c0_64 = arith.constant 0 : index
    %198 = vector.load %arg3[%c0_63, %c0_64] : memref<1x128xi32, #tpu.memory_space<vmem>>, vector<1x128xi32>
    tpu.vector_store %arg3[%c0_63, %c0_64], %197 {strides = array<i32>} : memref<1x128xi32, #tpu.memory_space<vmem>>, vector<1x128xi32>,
    return
  }
}

</mosaic_0001>

<llo_original>
// kernel: tpu_custom_call.1
$region0: #{tpu_custom_call.1}
  #allocation0 [shape = 'u32[]', space=smem, size = 0x4, offset = 0x4, fixed_abs, tag = 'smem constant byte address 0x4 - core index']
  #allocation1 [shape = 'u32[72,128]{1,0:T(1,128)}', space=vmem, size = 0x9000, scoped, tag = 'internal scratch']
  %s0 = inlined_call_operand.hbm [shape: s32[1,128], index: 0, kind: input, shape index: {}, may-alias: {0,3}]
  %s1 = inlined_call_operand.vmem [shape: s32[256,1], index: 1, kind: input, shape index: {}]
  %s2 = inlined_call_operand.vmem [shape: s32[256,1], index: 2, kind: input, shape index: {}]
  %s3 = inlined_call_operand.hbm [shape: s32[1,128], index: 3, kind: output, shape index: {}, may-alias: {0,3}]
  %s4 = sld [smem:[#allocation0]]
  $region26: #{tpu_custom_call.1} parent=0
    _
  %s6 = ssub.s32 1, %s4
  %s7 = scalar_select 0, %s6, %s4
  $region1: #{tpu_custom_call.1} parent=0
    #allocation2 [shape = 'u8[512]{0}', space=vmem, size = 0x400, scoped, tag = 'input window, operand 0, single buffered']
    #allocation3 [shape = 's32[1]{0}', space=sflag, size = 0x4, scoped, tag = 'scoped memory for tpu_custom_call.1']
    #allocation4 [shape = 's32[1]{0}', space=sflag, size = 0x4, scoped, tag = 'scoped memory for tpu_custom_call.1']
    #allocation5 [shape = 'u8[512]{0}', space=vmem, size = 0x400, scoped, tag = 'output window, operand 0, single buffered']
    %8 = vsyncpa [#allocation3], 0
    %9 = vsyncpa [#allocation4], 0
    // Predicated region
    $region2: #{tpu_custom_call.1} parent=1 // pred_check
      _
    $region3: #{tpu_custom_call.1} parent=1 // pred_check_branch
      %11 = sbr.rel (0) target = $region5
    $region4: #{tpu_custom_call.1} parent=1 // pred_region
      %13 = vsyncadd [#allocation3], 0
      %s15 = sshll.u32 %s0, 4
      %s16 = int_to_ptr.hbm [resolvable:$true] %s15
      %s17 = sshll.u32 [#allocation2], 4
      %s18 = int_to_ptr.vmem [resolvable:$true] %s17
      %20 = dma.hbm_to_vmem [thread:$0]  %s16, 16, %s18, [#allocation3]
    $region5: #{tpu_custom_call.1} parent=1 // pred_fallthru
      _
    // Predicated region
    $region6: #{tpu_custom_call.1} parent=1 // pred_check
      _
    $region7: #{tpu_custom_call.1} parent=1 // pred_check_branch
      %22 = sbr.rel (0) target = $region9
    $region8: #{tpu_custom_call.1} parent=1 // pred_region
      _
    $region9: #{tpu_custom_call.1} parent=1 // pred_fallthru
      _
    // Predicated region
    $region10: #{tpu_custom_call.1} parent=1 // pred_check
      _
    $region11: #{tpu_custom_call.1} parent=1 // pred_check_branch
      %24 = sbr.rel (0) target = $region13
    $region12: #{tpu_custom_call.1} parent=1 // pred_region
      _
    $region13: #{tpu_custom_call.1} parent=1 // pred_fallthru
      _
    // Predicated region
    $region14: #{tpu_custom_call.1} parent=1 // pred_check
      _
    $region15: #{tpu_custom_call.1} parent=1 // pred_check_branch
      %26 = sbr.rel (0) target = $region17
    $region16: #{tpu_custom_call.1} parent=1 // pred_region
      %28 = dma.done [#allocation3], 16
    $region17: #{tpu_custom_call.1} parent=1 // pred_fallthru
      _
    %v29 = vlaneseq
    %v30 = vand.u32 %v29, 127
    %v31 = vlaneseq
    %v32 = vshrl.u32 %v31, 7
    %v33 = vadd.s32 %v32, 8
    %v34 = vadd.s32 %v32, 16
    %v35 = vadd.s32 %v32, 24
    %v36 = vld [vmem:[%s1] sm:$0xff]
    %v37 = vld [vmem:[%s1 + $0x8] sm:$0xff]
    %v38 = vld [vmem:[%s1 + $0x10] sm:$0xff]
    %v39 = vld [vmem:[%s1 + $0x18] sm:$0xff]
    %v40 = vld [vmem:[%s2] sm:$0xff]
    %v41 = vld [vmem:[%s2 + $0x8] sm:$0xff]
    %v42 = vld [vmem:[%s2 + $0x10] sm:$0xff]
    %v43 = vld [vmem:[%s2 + $0x18] sm:$0xff]
    %44 = vset.pattern.permute.xlu0 0
    %45 = vperm.xlu0 %44, %v36
    %v46 = vpop.permute.xlu0 %45
    %47 = vset.pattern.permute.xlu0 0
    %48 = vperm.xlu0 %47, %v37
    %v49 = vpop.permute.xlu0 %48
    %50 = vset.pattern.permute.xlu0 0
    %51 = vperm.xlu0 %50, %v38
    %v52 = vpop.permute.xlu0 %51
    %53 = vset.pattern.permute.xlu0 0
    %54 = vperm.xlu0 %53, %v39
    %v55 = vpop.permute.xlu0 %54
    %vm56 = vcmp.eq.s32.totalorder %v46, %v30
    %vm57 = vcmp.eq.s32.totalorder %v49, %v30
    %vm58 = vcmp.eq.s32.totalorder %v52, %v30
    %vm59 = vcmp.eq.s32.totalorder %v55, %v30
    %v60 = vsel %vm56, %v32, 4294967295
    %v61 = vsel %vm57, %v33, 4294967295
    %v62 = vsel %vm58, %v34, 4294967295
    %v63 = vsel %vm59, %v35, 4294967295
    %vm64 = vcmp.gt.s32.totalorder %v60, %v61
    %v65 = vsel %vm64, %v60, %v61
    %vm66 = vcmp.gt.s32.totalorder %v62, %v63
    %v67 = vsel %vm66, %v62, %v63
    %vm68 = vcmp.gt.s32.totalorder %v65, %v67
    %v69 = vsel %vm68, %v65, %v67
    %v70 = vrot.slane %v69, 4
    %vm71 = vcmp.gt.s32.totalorder %v69, %v70
    %v72 = vsel %vm71, %v69, %v70
    %v73 = vrot.slane %v72, 2
    %vm74 = vcmp.gt.s32.totalorder %v72, %v73
    %v75 = vsel %vm74, %v72, %v73
    %v76 = vrot.slane %v75, 1
    %vm77 = vcmp.gt.s32.totalorder %v75, %v76
    %v78 = vsel %vm77, %v75, %v76
    %vm79 = vcmp.ge.s32.totalorder %v78, 0
    %vm80 = vcmp.eq.s32.totalorder %v60, %v78
    %vm81 = vcmp.eq.s32.totalorder %v61, %v78
    %vm82 = vcmp.eq.s32.totalorder %v62, %v78
    %vm83 = vcmp.eq.s32.totalorder %v63, %v78
    %84 = vset.pattern.permute.xlu0 0
    %85 = vperm.xlu0 %84, %v40
    %v86 = vpop.permute.xlu0 %85
    %87 = vset.pattern.permute.xlu0 0
    %88 = vperm.xlu0 %87, %v41
    %v89 = vpop.permute.xlu0 %88
    %90 = vset.pattern.permute.xlu0 0
    %91 = vperm.xlu0 %90, %v42
    %v92 = vpop.permute.xlu0 %91
    %93 = vset.pattern.permute.xlu0 0
    %94 = vperm.xlu0 %93, %v43
    %v95 = vpop.permute.xlu0 %94
    %v96 = vsel %vm80, %v86, 0
    %v97 = vsel %vm81, %v89, 0
    %v98 = vsel %vm82, %v92, 0
    %v99 = vsel %vm83, %v95, 0
    %v100 = vadd.s32 %v96, %v97
    %v101 = vadd.s32 %v98, %v99
    %v102 = vadd.s32 %v100, %v101
    %v103 = vrot.slane %v102, 4
    %v104 = vadd.s32 %v102, %v103
    %v105 = vrot.slane %v104, 2
    %v106 = vadd.s32 %v104, %v105
    %v107 = vrot.slane %v106, 1
    %v108 = vadd.s32 %v106, %v107
    %v109 = vsel %vm79, %v108, 0
    %s110 = scalar_lea.vmem %s1, 32
    %v111 = vld [vmem:[%s110] sm:$0xff]
    %v112 = vld [vmem:[%s110 + $0x8] sm:$0xff]
    %v113 = vld [vmem:[%s110 + $0x10] sm:$0xff]
    %v114 = vld [vmem:[%s110 + $0x18] sm:$0xff]
    %s115 = scalar_lea.vmem %s2, 32
    %v116 = vld [vmem:[%s115] sm:$0xff]
    %v117 = vld [vmem:[%s115 + $0x8] sm:$0xff]
    %v118 = vld [vmem:[%s115 + $0x10] sm:$0xff]
    %v119 = vld [vmem:[%s115 + $0x18] sm:$0xff]
    %120 = vset.pattern.permute.xlu0 0
    %121 = vperm.xlu0 %120, %v111
    %v122 = vpop.permute.xlu0 %121
    %123 = vset.pattern.permute.xlu0 0
    %124 = vperm.xlu0 %123, %v112
    %v125 = vpop.permute.xlu0 %124
    %126 = vset.pattern.permute.xlu0 0
    %127 = vperm.xlu0 %126, %v113
    %v128 = vpop.permute.xlu0 %127
    %129 = vset.pattern.permute.xlu0 0
    %130 = vperm.xlu0 %129, %v114
    %v131 = vpop.permute.xlu0 %130
    %vm132 = vcmp.eq.s32.totalorder %v122, %v30
    %vm133 = vcmp.eq.s32.totalorder %v125, %v30
    %vm134 = vcmp.eq.s32.totalorder %v128, %v30
    %vm135 = vcmp.eq.s32.totalorder %v131, %v30
    %v136 = vsel %vm132, %v32, 4294967295
    %v137 = vsel %vm133, %v33, 4294967295
    %v138 = vsel %vm134, %v34, 4294967295
    %v139 = vsel %vm135, %v35, 4294967295
    %vm140 = vcmp.gt.s32.totalorder %v136, %v137
    %v141 = vsel %vm140, %v136, %v137
    %vm142 = vcmp.gt.s32.totalorder %v138, %v139
    %v143 = vsel %vm142, %v138, %v139
    %vm144 = vcmp.gt.s32.totalorder %v141, %v143
    %v145 = vsel %vm144, %v141, %v143
    %v146 = vrot.slane %v145, 4
    %vm147 = vcmp.gt.s32.totalorder %v145, %v146
    %v148 = vsel %vm147, %v145, %v146
    %v149 = vrot.slane %v148, 2
    %vm150 = vcmp.gt.s32.totalorder %v148, %v149
    %v151 = vsel %vm150, %v148, %v149
    %v152 = vrot.slane %v151, 1
    %vm153 = vcmp.gt.s32.totalorder %v151, %v152
    %v154 = vsel %vm153, %v151, %v152
    %vm155 = vcmp.ge.s32.totalorder %v154, 0
    %vm156 = vcmp.eq.s32.totalorder %v136, %v154
    %vm157 = vcmp.eq.s32.totalorder %v137, %v154
    %vm158 = vcmp.eq.s32.totalorder %v138, %v154
    %vm159 = vcmp.eq.s32.totalorder %v139, %v154
    %160 = vset.pattern.permute.xlu0 0
    %161 = vperm.xlu0 %160, %v116
    %v162 = vpop.permute.xlu0 %161
    %163 = vset.pattern.permute.xlu0 0
    %164 = vperm.xlu0 %163, %v117
    %v165 = vpop.permute.xlu0 %164
    %166 = vset.pattern.permute.xlu0 0
    %167 = vperm.xlu0 %166, %v118
    %v168 = vpop.permute.xlu0 %167
    %169 = vset.pattern.permute.xlu0 0
    %170 = vperm.xlu0 %169, %v119
    %v171 = vpop.permute.xlu0 %170
    %v172 = vsel %vm156, %v162, 0
    %v173 = vsel %vm157, %v165, 0
    %v174 = vsel %vm158, %v168, 0
    %v175 = vsel %vm159, %v171, 0
    %v176 = vadd.s32 %v172, %v173
    %v177 = vadd.s32 %v174, %v175
    %v178 = vadd.s32 %v176, %v177
    %v179 = vrot.slane %v178, 4
    %v180 = vadd.s32 %v178, %v179
    %v181 = vrot.slane %v180, 2
    %v182 = vadd.s32 %v180, %v181
    %v183 = vrot.slane %v182, 1
    %v184 = vadd.s32 %v182, %v183
    %v185 = vsel %vm155, %v184, %v109
    %vm186 = vmor %vm79, %vm155
    %s187 = scalar_lea.vmem %s1, 64
    %v188 = vld [vmem:[%s187] sm:$0xff]
    %v189 = vld [vmem:[%s187 + $0x8] sm:$0xff]
    %v190 = vld [vmem:[%s187 + $0x10] sm:$0xff]
    %v191 = vld [vmem:[%s187 + $0x18] sm:$0xff]
    %s192 = scalar_lea.vmem %s2, 64
    %v193 = vld [vmem:[%s192] sm:$0xff]
    %v194 = vld [vmem:[%s192 + $0x8] sm:$0xff]
    %v195 = vld [vmem:[%s192 + $0x10] sm:$0xff]
    %v196 = vld [vmem:[%s192 + $0x18] sm:$0xff]
    %197 = vset.pattern.permute.xlu0 0
    %198 = vperm.xlu0 %197, %v188
    %v199 = vpop.permute.xlu0 %198
    %200 = vset.pattern.permute.xlu0 0
    %201 = vperm.xlu0 %200, %v189
    %v202 = vpop.permute.xlu0 %201
    %203 = vset.pattern.permute.xlu0 0
    %204 = vperm.xlu0 %203, %v190
    %v205 = vpop.permute.xlu0 %204
    %206 = vset.pattern.permute.xlu0 0
    %207 = vperm.xlu0 %206, %v191
    %v208 = vpop.permute.xlu0 %207
    %vm209 = vcmp.eq.s32.totalorder %v199, %v30
    %vm210 = vcmp.eq.s32.totalorder %v202, %v30
    %vm211 = vcmp.eq.s32.totalorder %v205, %v30
    %vm212 = vcmp.eq.s32.totalorder %v208, %v30
    %v213 = vsel %vm209, %v32, 4294967295
    %v214 = vsel %vm210, %v33, 4294967295
    %v215 = vsel %vm211, %v34, 4294967295
    %v216 = vsel %vm212, %v35, 4294967295
    %vm217 = vcmp.gt.s32.totalorder %v213, %v214
    %v218 = vsel %vm217, %v213, %v214
    %vm219 = vcmp.gt.s32.totalorder %v215, %v216
    %v220 = vsel %vm219, %v215, %v216
    %vm221 = vcmp.gt.s32.totalorder %v218, %v220
    %v222 = vsel %vm221, %v218, %v220
    %v223 = vrot.slane %v222, 4
    %vm224 = vcmp.gt.s32.totalorder %v222, %v223
    %v225 = vsel %vm224, %v222, %v223
    %v226 = vrot.slane %v225, 2
    %vm227 = vcmp.gt.s32.totalorder %v225, %v226
    %v228 = vsel %vm227, %v225, %v226
    %v229 = vrot.slane %v228, 1
    %vm230 = vcmp.gt.s32.totalorder %v228, %v229
    %v231 = vsel %vm230, %v228, %v229
    %vm232 = vcmp.ge.s32.totalorder %v231, 0
    %vm233 = vcmp.eq.s32.totalorder %v213, %v231
    %vm234 = vcmp.eq.s32.totalorder %v214, %v231
    %vm235 = vcmp.eq.s32.totalorder %v215, %v231
    %vm236 = vcmp.eq.s32.totalorder %v216, %v231
    %237 = vset.pattern.permute.xlu0 0
    %238 = vperm.xlu0 %237, %v193
    %v239 = vpop.permute.xlu0 %238
    %240 = vset.pattern.permute.xlu0 0
    %241 = vperm.xlu0 %240, %v194
    %v242 = vpop.permute.xlu0 %241
    %243 = vset.pattern.permute.xlu0 0
    %244 = vperm.xlu0 %243, %v195
    %v245 = vpop.permute.xlu0 %244
    %246 = vset.pattern.permute.xlu0 0
    %247 = vperm.xlu0 %246, %v196
    %v248 = vpop.permute.xlu0 %247
    %v249 = vsel %vm233, %v239, 0
    %v250 = vsel %vm234, %v242, 0
    %v251 = vsel %vm235, %v245, 0
    %v252 = vsel %vm236, %v248, 0
    %v253 = vadd.s32 %v249, %v250
    %v254 = vadd.s32 %v251, %v252
    %v255 = vadd.s32 %v253, %v254
    %v256 = vrot.slane %v255, 4
    %v257 = vadd.s32 %v255, %v256
    %v258 = vrot.slane %v257, 2
    %v259 = vadd.s32 %v257, %v258
    %v260 = vrot.slane %v259, 1
    %v261 = vadd.s32 %v259, %v260
    %v262 = vsel %vm232, %v261, %v185
    %vm263 = vmor %vm186, %vm232
    %s264 = scalar_lea.vmem %s1, 96
    %v265 = vld [vmem:[%s264] sm:$0xff]
    %v266 = vld [vmem:[%s264 + $0x8] sm:$0xff]
    %v267 = vld [vmem:[%s264 + $0x10] sm:$0xff]
    %v268 = vld [vmem:[%s264 + $0x18] sm:$0xff]
    %s269 = scalar_lea.vmem %s2, 96
    %v270 = vld [vmem:[%s269] sm:$0xff]
    %v271 = vld [vmem:[%s269 + $0x8] sm:$0xff]
    %v272 = vld [vmem:[%s269 + $0x10] sm:$0xff]
    %v273 = vld [vmem:[%s269 + $0x18] sm:$0xff]
    %274 = vset.pattern.permute.xlu0 0
    %275 = vperm.xlu0 %274, %v265
    %v276 = vpop.permute.xlu0 %275
    %277 = vset.pattern.permute.xlu0 0
    %278 = vperm.xlu0 %277, %v266
    %v279 = vpop.permute.xlu0 %278
    %280 = vset.pattern.permute.xlu0 0
    %281 = vperm.xlu0 %280, %v267
    %v282 = vpop.permute.xlu0 %281
    %283 = vset.pattern.permute.xlu0 0
    %284 = vperm.xlu0 %283, %v268
    %v285 = vpop.permute.xlu0 %284
    %vm286 = vcmp.eq.s32.totalorder %v276, %v30
    %vm287 = vcmp.eq.s32.totalorder %v279, %v30
    %vm288 = vcmp.eq.s32.totalorder %v282, %v30
    %vm289 = vcmp.eq.s32.totalorder %v285, %v30
    %v290 = vsel %vm286, %v32, 4294967295
    %v291 = vsel %vm287, %v33, 4294967295
    %v292 = vsel %vm288, %v34, 4294967295
    %v293 = vsel %vm289, %v35, 4294967295
    %vm294 = vcmp.gt.s32.totalorder %v290, %v291
    %v295 = vsel %vm294, %v290, %v291
    %vm296 = vcmp.gt.s32.totalorder %v292, %v293
    %v297 = vsel %vm296, %v292, %v293
    %vm298 = vcmp.gt.s32.totalorder %v295, %v297
    %v299 = vsel %vm298, %v295, %v297
    %v300 = vrot.slane %v299, 4
    %vm301 = vcmp.gt.s32.totalorder %v299, %v300
    %v302 = vsel %vm301, %v299, %v300
    %v303 = vrot.slane %v302, 2
    %vm304 = vcmp.gt.s32.totalorder %v302, %v303
    %v305 = vsel %vm304, %v302, %v303
    %v306 = vrot.slane %v305, 1
    %vm307 = vcmp.gt.s32.totalorder %v305, %v306
    %v308 = vsel %vm307, %v305, %v306
    %vm309 = vcmp.ge.s32.totalorder %v308, 0
    %vm310 = vcmp.eq.s32.totalorder %v290, %v308
    %vm311 = vcmp.eq.s32.totalorder %v291, %v308
    %vm312 = vcmp.eq.s32.totalorder %v292, %v308
    %vm313 = vcmp.eq.s32.totalorder %v293, %v308
    %314 = vset.pattern.permute.xlu0 0
    %315 = vperm.xlu0 %314, %v270
    %v316 = vpop.permute.xlu0 %315
    %317 = vset.pattern.permute.xlu0 0
    %318 = vperm.xlu0 %317, %v271
    %v319 = vpop.permute.xlu0 %318
    %320 = vset.pattern.permute.xlu0 0
    %321 = vperm.xlu0 %320, %v272
    %v322 = vpop.permute.xlu0 %321
    %323 = vset.pattern.permute.xlu0 0
    %324 = vperm.xlu0 %323, %v273
    %v325 = vpop.permute.xlu0 %324
    %v326 = vsel %vm310, %v316, 0
    %v327 = vsel %vm311, %v319, 0
    %v328 = vsel %vm312, %v322, 0
    %v329 = vsel %vm313, %v325, 0
    %v330 = vadd.s32 %v326, %v327
    %v331 = vadd.s32 %v328, %v329
    %v332 = vadd.s32 %v330, %v331
    %v333 = vrot.slane %v332, 4
    %v334 = vadd.s32 %v332, %v333
    %v335 = vrot.slane %v334, 2
    %v336 = vadd.s32 %v334, %v335
    %v337 = vrot.slane %v336, 1
    %v338 = vadd.s32 %v336, %v337
    %v339 = vsel %vm309, %v338, %v262
    %vm340 = vmor %vm263, %vm309
    %s341 = scalar_lea.vmem %s1, 128
    %v342 = vld [vmem:[%s341] sm:$0xff]
    %v343 = vld [vmem:[%s341 + $0x8] sm:$0xff]
    %v344 = vld [vmem:[%s341 + $0x10] sm:$0xff]
    %v345 = vld [vmem:[%s341 + $0x18] sm:$0xff]
    %s346 = scalar_lea.vmem %s2, 128
    %v347 = vld [vmem:[%s346] sm:$0xff]
    %v348 = vld [vmem:[%s346 + $0x8] sm:$0xff]
    %v349 = vld [vmem:[%s346 + $0x10] sm:$0xff]
    %v350 = vld [vmem:[%s346 + $0x18] sm:$0xff]
    %351 = vset.pattern.permute.xlu0 0
    %352 = vperm.xlu0 %351, %v342
    %v353 = vpop.permute.xlu0 %352
    %354 = vset.pattern.permute.xlu0 0
    %355 = vperm.xlu0 %354, %v343
    %v356 = vpop.permute.xlu0 %355
    %357 = vset.pattern.permute.xlu0 0
    %358 = vperm.xlu0 %357, %v344
    %v359 = vpop.permute.xlu0 %358
    %360 = vset.pattern.permute.xlu0 0
    %361 = vperm.xlu0 %360, %v345
    %v362 = vpop.permute.xlu0 %361
    %vm363 = vcmp.eq.s32.totalorder %v353, %v30
    %vm364 = vcmp.eq.s32.totalorder %v356, %v30
    %vm365 = vcmp.eq.s32.totalorder %v359, %v30
    %vm366 = vcmp.eq.s32.totalorder %v362, %v30
    %v367 = vsel %vm363, %v32, 4294967295
    %v368 = vsel %vm364, %v33, 4294967295
    %v369 = vsel %vm365, %v34, 4294967295
    %v370 = vsel %vm366, %v35, 4294967295
    %vm371 = vcmp.gt.s32.totalorder %v367, %v368
    %v372 = vsel %vm371, %v367, %v368
    %vm373 = vcmp.gt.s32.totalorder %v369, %v370
    %v374 = vsel %vm373, %v369, %v370
    %vm375 = vcmp.gt.s32.totalorder %v372, %v374
    %v376 = vsel %vm375, %v372, %v374
    %v377 = vrot.slane %v376, 4
    %vm378 = vcmp.gt.s32.totalorder %v376, %v377
    %v379 = vsel %vm378, %v376, %v377
    %v380 = vrot.slane %v379, 2
    %vm381 = vcmp.gt.s32.totalorder %v379, %v380
    %v382 = vsel %vm381, %v379, %v380
    %v383 = vrot.slane %v382, 1
    %vm384 = vcmp.gt.s32.totalorder %v382, %v383
    %v385 = vsel %vm384, %v382, %v383
    %vm386 = vcmp.ge.s32.totalorder %v385, 0
    %vm387 = vcmp.eq.s32.totalorder %v367, %v385
    %vm388 = vcmp.eq.s32.totalorder %v368, %v385
    %vm389 = vcmp.eq.s32.totalorder %v369, %v385
    %vm390 = vcmp.eq.s32.totalorder %v370, %v385
    %391 = vset.pattern.permute.xlu0 0
    %392 = vperm.xlu0 %391, %v347
    %v393 = vpop.permute.xlu0 %392
    %394 = vset.pattern.permute.xlu0 0
    %395 = vperm.xlu0 %394, %v348
    %v396 = vpop.permute.xlu0 %395
    %397 = vset.pattern.permute.xlu0 0
    %398 = vperm.xlu0 %397, %v349
    %v399 = vpop.permute.xlu0 %398
    %400 = vset.pattern.permute.xlu0 0
    %401 = vperm.xlu0 %400, %v350
    %v402 = vpop.permute.xlu0 %401
    %v403 = vsel %vm387, %v393, 0
    %v404 = vsel %vm388, %v396, 0
    %v405 = vsel %vm389, %v399, 0
    %v406 = vsel %vm390, %v402, 0
    %v407 = vadd.s32 %v403, %v404
    %v408 = vadd.s32 %v405, %v406
    %v409 = vadd.s32 %v407, %v408
    %v410 = vrot.slane %v409, 4
    %v411 = vadd.s32 %v409, %v410
    %v412 = vrot.slane %v411, 2
    %v413 = vadd.s32 %v411, %v412
    %v414 = vrot.slane %v413, 1
    %v415 = vadd.s32 %v413, %v414
    %v416 = vsel %vm386, %v415, %v339
    %vm417 = vmor %vm340, %vm386
    %s418 = scalar_lea.vmem %s1, 160
    %v419 = vld [vmem:[%s418] sm:$0xff]
    %v420 = vld [vmem:[%s418 + $0x8] sm:$0xff]
    %v421 = vld [vmem:[%s418 + $0x10] sm:$0xff]
    %v422 = vld [vmem:[%s418 + $0x18] sm:$0xff]
    %s423 = scalar_lea.vmem %s2, 160
    %v424 = vld [vmem:[%s423] sm:$0xff]
    %v425 = vld [vmem:[%s423 + $0x8] sm:$0xff]
    %v426 = vld [vmem:[%s423 + $0x10] sm:$0xff]
    %v427 = vld [vmem:[%s423 + $0x18] sm:$0xff]
    %428 = vset.pattern.permute.xlu0 0
    %429 = vperm.xlu0 %428, %v419
    %v430 = vpop.permute.xlu0 %429
    %431 = vset.pattern.permute.xlu0 0
    %432 = vperm.xlu0 %431, %v420
    %v433 = vpop.permute.xlu0 %432
    %434 = vset.pattern.permute.xlu0 0
    %435 = vperm.xlu0 %434, %v421
    %v436 = vpop.permute.xlu0 %435
    %437 = vset.pattern.permute.xlu0 0
    %438 = vperm.xlu0 %437, %v422
    %v439 = vpop.permute.xlu0 %438
    %vm440 = vcmp.eq.s32.totalorder %v430, %v30
    %vm441 = vcmp.eq.s32.totalorder %v433, %v30
    %vm442 = vcmp.eq.s32.totalorder %v436, %v30
    %vm443 = vcmp.eq.s32.totalorder %v439, %v30
    %v444 = vsel %vm440, %v32, 4294967295
    %v445 = vsel %vm441, %v33, 4294967295
    %v446 = vsel %vm442, %v34, 4294967295
    %v447 = vsel %vm443, %v35, 4294967295
    %vm448 = vcmp.gt.s32.totalorder %v444, %v445
    %v449 = vsel %vm448, %v444, %v445
    %vm450 = vcmp.gt.s32.totalorder %v446, %v447
    %v451 = vsel %vm450, %v446, %v447
    %vm452 = vcmp.gt.s32.totalorder %v449, %v451
    %v453 = vsel %vm452, %v449, %v451
    %v454 = vrot.slane %v453, 4
    %vm455 = vcmp.gt.s32.totalorder %v453, %v454
    %v456 = vsel %vm455, %v453, %v454
    %v457 = vrot.slane %v456, 2
    %vm458 = vcmp.gt.s32.totalorder %v456, %v457
    %v459 = vsel %vm458, %v456, %v457
    %v460 = vrot.slane %v459, 1
    %vm461 = vcmp.gt.s32.totalorder %v459, %v460
    %v462 = vsel %vm461, %v459, %v460
    %vm463 = vcmp.ge.s32.totalorder %v462, 0
    %vm464 = vcmp.eq.s32.totalorder %v444, %v462
    %vm465 = vcmp.eq.s32.totalorder %v445, %v462
    %vm466 = vcmp.eq.s32.totalorder %v446, %v462
    %vm467 = vcmp.eq.s32.totalorder %v447, %v462
    %468 = vset.pattern.permute.xlu0 0
    %469 = vperm.xlu0 %468, %v424
    %v470 = vpop.permute.xlu0 %469
    %471 = vset.pattern.permute.xlu0 0
    %472 = vperm.xlu0 %471, %v425
    %v473 = vpop.permute.xlu0 %472
    %474 = vset.pattern.permute.xlu0 0
    %475 = vperm.xlu0 %474, %v426
    %v476 = vpop.permute.xlu0 %475
    %477 = vset.pattern.permute.xlu0 0
    %478 = vperm.xlu0 %477, %v427
    %v479 = vpop.permute.xlu0 %478
    %v480 = vsel %vm464, %v470, 0
    %v481 = vsel %vm465, %v473, 0
    %v482 = vsel %vm466, %v476, 0
    %v483 = vsel %vm467, %v479, 0
    %v484 = vadd.s32 %v480, %v481
    %v485 = vadd.s32 %v482, %v483
    %v486 = vadd.s32 %v484, %v485
    %v487 = vrot.slane %v486, 4
    %v488 = vadd.s32 %v486, %v487
    %v489 = vrot.slane %v488, 2
    %v490 = vadd.s32 %v488, %v489
    %v491 = vrot.slane %v490, 1
    %v492 = vadd.s32 %v490, %v491
    %v493 = vsel %vm463, %v492, %v416
    %vm494 = vmor %vm417, %vm463
    %s495 = scalar_lea.vmem %s1, 192
    %v496 = vld [vmem:[%s495] sm:$0xff]
    %v497 = vld [vmem:[%s495 + $0x8] sm:$0xff]
    %v498 = vld [vmem:[%s495 + $0x10] sm:$0xff]
    %v499 = vld [vmem:[%s495 + $0x18] sm:$0xff]
    %s500 = scalar_lea.vmem %s2, 192
    %v501 = vld [vmem:[%s500] sm:$0xff]
    %v502 = vld [vmem:[%s500 + $0x8] sm:$0xff]
    %v503 = vld [vmem:[%s500 + $0x10] sm:$0xff]
    %v504 = vld [vmem:[%s500 + $0x18] sm:$0xff]
    %505 = vset.pattern.permute.xlu0 0
    %506 = vperm.xlu0 %505, %v496
    %v507 = vpop.permute.xlu0 %506
    %508 = vset.pattern.permute.xlu0 0
    %509 = vperm.xlu0 %508, %v497
    %v510 = vpop.permute.xlu0 %509
    %511 = vset.pattern.permute.xlu0 0
    %512 = vperm.xlu0 %511, %v498
    %v513 = vpop.permute.xlu0 %512
    %514 = vset.pattern.permute.xlu0 0
    %515 = vperm.xlu0 %514, %v499
    %v516 = vpop.permute.xlu0 %515
    %vm517 = vcmp.eq.s32.totalorder %v507, %v30
    %vm518 = vcmp.eq.s32.totalorder %v510, %v30
    %vm519 = vcmp.eq.s32.totalorder %v513, %v30
    %vm520 = vcmp.eq.s32.totalorder %v516, %v30
    %v521 = vsel %vm517, %v32, 4294967295
    %v522 = vsel %vm518, %v33, 4294967295
    %v523 = vsel %vm519, %v34, 4294967295
    %v524 = vsel %vm520, %v35, 4294967295
    %vm525 = vcmp.gt.s32.totalorder %v521, %v522
    %v526 = vsel %vm525, %v521, %v522
    %vm527 = vcmp.gt.s32.totalorder %v523, %v524
    %v528 = vsel %vm527, %v523, %v524
    %vm529 = vcmp.gt.s32.totalorder %v526, %v528
    %v530 = vsel %vm529, %v526, %v528
    %v531 = vrot.slane %v530, 4
    %vm532 = vcmp.gt.s32.totalorder %v530, %v531
    %v533 = vsel %vm532, %v530, %v531
    %v534 = vrot.slane %v533, 2
    %vm535 = vcmp.gt.s32.totalorder %v533, %v534
    %v536 = vsel %vm535, %v533, %v534
    %v537 = vrot.slane %v536, 1
    %vm538 = vcmp.gt.s32.totalorder %v536, %v537
    %v539 = vsel %vm538, %v536, %v537
    %vm540 = vcmp.ge.s32.totalorder %v539, 0
    %vm541 = vcmp.eq.s32.totalorder %v521, %v539
    %vm542 = vcmp.eq.s32.totalorder %v522, %v539
    %vm543 = vcmp.eq.s32.totalorder %v523, %v539
    %vm544 = vcmp.eq.s32.totalorder %v524, %v539
    %545 = vset.pattern.permute.xlu0 0
    %546 = vperm.xlu0 %545, %v501
    %v547 = vpop.permute.xlu0 %546
    %548 = vset.pattern.permute.xlu0 0
    %549 = vperm.xlu0 %548, %v502
    %v550 = vpop.permute.xlu0 %549
    %551 = vset.pattern.permute.xlu0 0
    %552 = vperm.xlu0 %551, %v503
    %v553 = vpop.permute.xlu0 %552
    %554 = vset.pattern.permute.xlu0 0
    %555 = vperm.xlu0 %554, %v504
    %v556 = vpop.permute.xlu0 %555
    %v557 = vsel %vm541, %v547, 0
    %v558 = vsel %vm542, %v550, 0
    %v559 = vsel %vm543, %v553, 0
    %v560 = vsel %vm544, %v556, 0
    %v561 = vadd.s32 %v557, %v558
    %v562 = vadd.s32 %v559, %v560
    %v563 = vadd.s32 %v561, %v562
    %v564 = vrot.slane %v563, 4
    %v565 = vadd.s32 %v563, %v564
    %v566 = vrot.slane %v565, 2
    %v567 = vadd.s32 %v565, %v566
    %v568 = vrot.slane %v567, 1
    %v569 = vadd.s32 %v567, %v568
    %v570 = vsel %vm540, %v569, %v493
    %vm571 = vmor %vm494, %vm540
    %s572 = scalar_lea.vmem %s1, 224
    %v573 = vld [vmem:[%s572] sm:$0xff]
    %v574 = vld [vmem:[%s572 + $0x8] sm:$0xff]
    %v575 = vld [vmem:[%s572 + $0x10] sm:$0xff]
    %v576 = vld [vmem:[%s572 + $0x18] sm:$0xff]
    %s577 = scalar_lea.vmem %s2, 224
    %v578 = vld [vmem:[%s577] sm:$0xff]
    %v579 = vld [vmem:[%s577 + $0x8] sm:$0xff]
    %v580 = vld [vmem:[%s577 + $0x10] sm:$0xff]
    %v581 = vld [vmem:[%s577 + $0x18] sm:$0xff]
    %582 = vset.pattern.permute.xlu0 0
    %583 = vperm.xlu0 %582, %v573
    %v584 = vpop.permute.xlu0 %583
    %585 = vset.pattern.permute.xlu0 0
    %586 = vperm.xlu0 %585, %v574
    %v587 = vpop.permute.xlu0 %586
    %588 = vset.pattern.permute.xlu0 0
    %589 = vperm.xlu0 %588, %v575
    %v590 = vpop.permute.xlu0 %589
    %591 = vset.pattern.permute.xlu0 0
    %592 = vperm.xlu0 %591, %v576
    %v593 = vpop.permute.xlu0 %592
    %vm594 = vcmp.eq.s32.totalorder %v584, %v30
    %vm595 = vcmp.eq.s32.totalorder %v587, %v30
    %vm596 = vcmp.eq.s32.totalorder %v590, %v30
    %vm597 = vcmp.eq.s32.totalorder %v593, %v30
    %v598 = vsel %vm594, %v32, 4294967295
    %v599 = vsel %vm595, %v33, 4294967295
    %v600 = vsel %vm596, %v34, 4294967295
    %v601 = vsel %vm597, %v35, 4294967295
    %vm602 = vcmp.gt.s32.totalorder %v598, %v599
    %v603 = vsel %vm602, %v598, %v599
    %vm604 = vcmp.gt.s32.totalorder %v600, %v601
    %v605 = vsel %vm604, %v600, %v601
    %vm606 = vcmp.gt.s32.totalorder %v603, %v605
    %v607 = vsel %vm606, %v603, %v605
    %v608 = vrot.slane %v607, 4
    %vm609 = vcmp.gt.s32.totalorder %v607, %v608
    %v610 = vsel %vm609, %v607, %v608
    %v611 = vrot.slane %v610, 2
    %vm612 = vcmp.gt.s32.totalorder %v610, %v611
    %v613 = vsel %vm612, %v610, %v611
    %v614 = vrot.slane %v613, 1
    %vm615 = vcmp.gt.s32.totalorder %v613, %v614
    %v616 = vsel %vm615, %v613, %v614
    %vm617 = vcmp.ge.s32.totalorder %v616, 0
    %vm618 = vcmp.eq.s32.totalorder %v598, %v616
    %vm619 = vcmp.eq.s32.totalorder %v599, %v616
    %vm620 = vcmp.eq.s32.totalorder %v600, %v616
    %vm621 = vcmp.eq.s32.totalorder %v601, %v616
    %622 = vset.pattern.permute.xlu0 0
    %623 = vperm.xlu0 %622, %v578
    %v624 = vpop.permute.xlu0 %623
    %625 = vset.pattern.permute.xlu0 0
    %626 = vperm.xlu0 %625, %v579
    %v627 = vpop.permute.xlu0 %626
    %628 = vset.pattern.permute.xlu0 0
    %629 = vperm.xlu0 %628, %v580
    %v630 = vpop.permute.xlu0 %629
    %631 = vset.pattern.permute.xlu0 0
    %632 = vperm.xlu0 %631, %v581
    %v633 = vpop.permute.xlu0 %632
    %v634 = vsel %vm618, %v624, 0
    %v635 = vsel %vm619, %v627, 0
    %v636 = vsel %vm620, %v630, 0
    %v637 = vsel %vm621, %v633, 0
    %v638 = vadd.s32 %v634, %v635
    %v639 = vadd.s32 %v636, %v637
    %v640 = vadd.s32 %v638, %v639
    %v641 = vrot.slane %v640, 4
    %v642 = vadd.s32 %v640, %v641
    %v643 = vrot.slane %v642, 2
    %v644 = vadd.s32 %v642, %v643
    %v645 = vrot.slane %v644, 1
    %v646 = vadd.s32 %v644, %v645
    %v647 = vsel %vm617, %v646, %v570
    %vm648 = vmor %vm571, %vm617
    %v649 = vld [vmem:[#allocation2] sm:$0x1]
    %v650 = vsel %vm648, %v647, %v649
    %651 = vst [vmem:[#allocation5] sm:$0x1] %v650
    // Predicated region
    $region18: #{tpu_custom_call.1} parent=1 // pred_check
      _
    $region19: #{tpu_custom_call.1} parent=1 // pred_check_branch
      %653 = sbr.rel (0) target = $region21
    $region20: #{tpu_custom_call.1} parent=1 // pred_region
      %655 = vsyncadd [#allocation4], 0
      %s657 = sshll.u32 [#allocation5], 4
      %s658 = int_to_ptr.vmem [resolvable:$true] %s657
      %s659 = sshll.u32 %s3, 4
      %s660 = int_to_ptr.hbm [resolvable:$true] %s659
      %662 = dma.vmem_to_hbm [thread:$0]  %s658, 16, %s660, [#allocation4]
    $region21: #{tpu_custom_call.1} parent=1 // pred_fallthru
      _
    // Predicated region
    $region22: #{tpu_custom_call.1} parent=1 // pred_check
      _
    $region23: #{tpu_custom_call.1} parent=1 // pred_check_branch
      %664 = sbr.rel (0) target = $region25
    $region24: #{tpu_custom_call.1} parent=1 // pred_region
      %666 = dma.done [#allocation4], 16
    $region25: #{tpu_custom_call.1} parent=1 // pred_fallthru
      _
    %667 = vsyncpa [#allocation3], 1
    %668 = vsyncpa [#allocation4], 1

</llo_original>
